<compile_context>
chip_gen: v7x
topology: tpu7x:2x2x1
jax: 0.10.0
libtpu: 0.0.40
codegen_flags: <defaults>
</compile_context>

<pallas_src>
import functools

import jax
import jax.numpy as jnp
from jax.experimental import pallas as pl
from jax.experimental.pallas import tpu as pltpu


def _round_up(a: int, b: int) -> int:
    return (a + b - 1) // b * b


def _device_kind() -> str:
    try:
        return jax.devices()[0].device_kind.lower()
    except Exception:
        return ""


def _dyrelu_kernel(x_ref, coef_ref, o_ref, *, k: int, compute_dtype):
    # x_ref:    (TR, TS)  tile of flattened activations
    # coef_ref: (TR, 2k)  per-row coefficients [a_0..a_{k-1}, b_0..b_{k-1}] (f32 in HBM)
    x = x_ref[...].astype(compute_dtype)
    coefs = coef_ref[...].astype(compute_dtype)     # single read; slice the value below
    out = x * coefs[:, 0:1] + coefs[:, k:k + 1]
    for j in range(1, k):
        out = jnp.maximum(out, x * coefs[:, j:j + 1] + coefs[:, k + j:k + j + 1])
    o_ref[...] = out.astype(o_ref.dtype)


def my_dyrelu(
    x: jax.Array,
    relu_coefs: jax.Array,
    k: int,
    *,
    row_tile: int = 512,
    col_tile: int = 2048,
    donate_x: bool = False,
) -> jax.Array:
    """x: (B, C, H, W), relu_coefs: (B, C, 2k) -> (B, C, H, W)."""
    B, C, H, W = x.shape
    assert relu_coefs.shape == (B, C, 2 * k)
    R = B * C
    S = H * W

    x2 = x.reshape(R, S)
    # Coefficients stay f32 HBM-side (tiny; precision-safe regardless of activation dtype).
    coefs2 = relu_coefs.reshape(R, 2 * k).astype(jnp.float32)

    kind = _device_kind()
    is_v5 = "v5" in kind
    is_v6 = "v6" in kind

    # bf16 math is fine on v6e/v7x VPUs; v5e has no bf16 VALU -> upcast there.
    if x.dtype == jnp.bfloat16 and not is_v5:
        compute_dtype = jnp.bfloat16
    else:
        compute_dtype = jnp.float32

    # Sublane packing multiple for the activation dtype: 8 (f32), 16 (bf16), 32 (int8/fp8).
    itemsize = jnp.dtype(x.dtype).itemsize
    sublane = max(8, 32 // max(itemsize, 1))

    tr = min(_round_up(row_tile, sublane), _round_up(R, sublane))
    if S < 128:
        ts = S  # full-extent lane block (masked narrow store; only for tiny spatial dims)
    else:
        # Multiple of 128 -> dense vst; ragged last block handled by Pallas (masked store).
        ts = min(_round_up(col_tile, 128), _round_up(S, 128))

    grid = (pl.cdiv(R, tr), pl.cdiv(S, ts))  # S-tile axis innermost: coef block reused

    # v6e has 128 MiB VMEM -> give the compiler more room; v7x only has 64 MiB physical.
    vmem_limit = (96 if is_v6 else 48) * 1024 * 1024

    elem = B * C * H * W
    cost = pl.CostEstimate(
        flops=(3 * k - 1) * elem,
        transcendentals=0,
        bytes_accessed=2 * elem * itemsize + coefs2.size * 4,
    )

    out2 = pl.pallas_call(
        functools.partial(_dyrelu_kernel, k=k, compute_dtype=compute_dtype),
        out_shape=jax.ShapeDtypeStruct((R, S), x.dtype),
        grid_spec=pltpu.PrefetchScalarGridSpec(
            num_scalar_prefetch=0,
            grid=grid,
            in_specs=[
                pl.BlockSpec((tr, ts), lambda i, j: (i, j)),
                # Coefficient block depends only on the row-tile index.
                pl.BlockSpec((tr, 2 * k), lambda i, j: (i, 0)),
            ],
            out_specs=pl.BlockSpec((tr, ts), lambda i, j: (i, j)),
        ),
        compiler_params=pltpu.CompilerParams(
            dimension_semantics=("parallel", "parallel"),
            vmem_limit_bytes=vmem_limit,
        ),
        cost_estimate=cost,
        # Optional: reuse x's HBM buffer for the output (only if the caller is done with x).
        input_output_aliases=({0: 0} if donate_x else {}),
    )(x2, coefs2)

    return out2.reshape(B, C, H, W)


def my_dyrelu_ref(x, relu_coefs, k):
    # pure-JAX reference mirroring the PyTorch code
    x_perm = jnp.transpose(x, (2, 3, 0, 1))[..., None]              # (H, W, B, C, 1)
    output = x_perm * relu_coefs[:, :, :k] + relu_coefs[:, :, k:]   # (H, W, B, C, k)
    result = jnp.max(output, axis=-1)                               # (H, W, B, C)
    return jnp.transpose(result, (2, 3, 0, 1))                      # (B, C, H, W)


if __name__ == "__main__":
    key = jax.random.PRNGKey(0)
    k = 2
    B, C, H, W = 2, 4, 16, 16

    kx, kc = jax.random.split(key)
    x = jax.random.normal(kx, (B, C, H, W), dtype=jnp.float32)
    # deterministic synthetic coefficients: (B, C, 2k)
    relu_coefs = jax.random.normal(kc, (B, C, 2 * k), dtype=jnp.float32) * 0.5
    # make branch 0 look like a standard ReLU-ish affine (a=1, b=0) plus noise
    relu_coefs = relu_coefs.at[:, :, 0].add(1.0)

    out = my_dyrelu(x, relu_coefs, k)
    jax.block_until_ready(out)

    ref = my_dyrelu_ref(x, relu_coefs, k)
    assert out.shape == (B, C, H, W)
    assert jnp.allclose(out, ref, atol=1e-5, rtol=1e-5), "mismatch vs reference"

    # Also exercise a ragged-S shape (H*W not a multiple of 128) to confirm the
    # no-pad path handles the partial last lane block correctly.
    H2, W2 = 10, 13  # S = 130
    x_r = jax.random.normal(kx, (B, C, H2, W2), dtype=jnp.float32)
    out_r = my_dyrelu(x_r, relu_coefs, k)
    jax.block_until_ready(out_r)
    ref_r = my_dyrelu_ref(x_r, relu_coefs, k)
    assert jnp.allclose(out_r, ref_r, atol=1e-5, rtol=1e-5), "mismatch (ragged S) vs reference"

    print("KERNEL_OK")
</pallas_src>

<mosaic_0001>
module attributes {stable_mosaic.version = 11 : i64} {
  func.func @_dyrelu_kernel(%arg0: i32, %arg1: i32, %arg2: memref<8x256xf32, #tpu.memory_space<vmem>>, %arg3: memref<8x4xf32, #tpu.memory_space<vmem>>, %arg4: memref<8x256xf32, #tpu.memory_space<vmem>>) attributes {dimension_semantics = [#tpu.dimension_semantics<parallel>, #tpu.dimension_semantics<parallel>], iteration_bounds = array<i64: 1, 1>, scalar_prefetch = 0 : i64, scratch_operands = 0 : i64, tpu.core_type = #tpu.core_type<tc>, window_params = [{transform_indices = @transform_0, window_bounds = array<i64: 8, 256>}, {transform_indices = @transform_1, window_bounds = array<i64: 8, 4>}, {transform_indices = @transform_2, window_bounds = array<i64: 8, 256>}]} {
    %c0 = arith.constant 0 : index
    %c0_0 = arith.constant 0 : index
    %0 = vector.load %arg2[%c0, %c0_0] : memref<8x256xf32, #tpu.memory_space<vmem>>, vector<8x256xf32>
    %c0_1 = arith.constant 0 : index
    %c0_2 = arith.constant 0 : index
    %1 = vector.load %arg3[%c0_1, %c0_2] : memref<8x4xf32, #tpu.memory_space<vmem>>, vector<8x4xf32>
    %2 = vector.extract_strided_slice %1 {offsets = [0, 0], sizes = [8, 1], strides = [1, 1]} : vector<8x4xf32> to vector<8x1xf32>
    %3 = vector.broadcast %2 : vector<8x1xf32> to vector<8x256xf32>
    %4 = arith.mulf %0, %3 : vector<8x256xf32>
    %5 = vector.extract_strided_slice %1 {offsets = [0, 2], sizes = [8, 1], strides = [1, 1]} : vector<8x4xf32> to vector<8x1xf32>
    %6 = vector.broadcast %5 : vector<8x1xf32> to vector<8x256xf32>
    %7 = arith.addf %4, %6 : vector<8x256xf32>
    %8 = vector.extract_strided_slice %1 {offsets = [0, 1], sizes = [8, 1], strides = [1, 1]} : vector<8x4xf32> to vector<8x1xf32>
    %9 = vector.broadcast %8 : vector<8x1xf32> to vector<8x256xf32>
    %10 = arith.mulf %0, %9 : vector<8x256xf32>
    %11 = vector.extract_strided_slice %1 {offsets = [0, 3], sizes = [8, 1], strides = [1, 1]} : vector<8x4xf32> to vector<8x1xf32>
    %12 = vector.broadcast %11 : vector<8x1xf32> to vector<8x256xf32>
    %13 = arith.addf %10, %12 : vector<8x256xf32>
    %14 = arith.maximumf %7, %13 : vector<8x256xf32>
    %c0_3 = arith.constant 0 : index
    %c0_4 = arith.constant 0 : index
    %15 = vector.load %arg4[%c0_3, %c0_4] : memref<8x256xf32, #tpu.memory_space<vmem>>, vector<8x256xf32>
    tpu.vector_store %arg4[%c0_3, %c0_4], %14 {strides = array<i32>} : memref<8x256xf32, #tpu.memory_space<vmem>>, vector<8x256xf32>,
    return
  }
  func.func @transform_0(%arg0: i32, %arg1: i32) -> (i32, i32) {
    %c0_i32 = arith.constant 0 : i32
    return %arg0, %arg1 : i32, i32
  }
  func.func @transform_1(%arg0: i32, %arg1: i32) -> (i32, i32) {
    %c0_i32 = arith.constant 0 : i32
    %c0_i32_0 = arith.constant 0 : i32
    return %arg0, %c0_i32 : i32, i32
  }
  func.func @transform_2(%arg0: i32, %arg1: i32) -> (i32, i32) {
    %c0_i32 = arith.constant 0 : i32
    return %arg0, %arg1 : i32, i32
  }
}

</mosaic_0001>

<llo_original>
// kernel: tpu_custom_call.1
$region0: #{tpu_custom_call.1}
  #allocation0 [shape = 'u32[]', space=smem, size = 0x4, offset = 0x4, fixed_abs, tag = 'smem constant byte address 0x4 - core index']
  #allocation1 [shape = 'u32[144,128]{1,0:T(1,128)}', space=vmem, size = 0x12000, scoped, tag = 'internal scratch']
  %s0 = inlined_call_operand.hbm [shape: f32[8,256], index: 0, kind: input, shape index: {}]
  %s1 = inlined_call_operand.vmem [shape: f32[8,4], index: 1, kind: input, shape index: {}]
  %s2 = inlined_call_operand.hbm [shape: f32[8,256], index: 2, kind: output, shape index: {}]
  %s3 = sld [smem:[#allocation0]]
  $region22: #{tpu_custom_call.1} parent=0
    _
  %s5 = ssub.s32 1, %s3
  %s6 = scalar_select 0, %s5, %s3
  $region1: #{tpu_custom_call.1} parent=0
    #allocation2 [shape = 'u8[8192]{0}', space=vmem, size = 0x2000, scoped, tag = 'input window, operand 0, single buffered']
    #allocation3 [shape = 's32[1]{0}', space=sflag, size = 0x4, scoped, tag = 'scoped memory for tpu_custom_call.1']
    #allocation4 [shape = 's32[1]{0}', space=sflag, size = 0x4, scoped, tag = 'scoped memory for tpu_custom_call.1']
    #allocation5 [shape = 'u8[8192]{0}', space=vmem, size = 0x2000, scoped, tag = 'output window, operand 0, single buffered']
    %7 = vsyncpa [#allocation3], 0
    %8 = vsyncpa [#allocation4], 0
    // Predicated region
    $region2: #{tpu_custom_call.1} parent=1 // pred_check
      _
    $region3: #{tpu_custom_call.1} parent=1 // pred_check_branch
      %10 = sbr.rel (0) target = $region5
    $region4: #{tpu_custom_call.1} parent=1 // pred_region
      %s12 = ssub.s32 256, 256
      %13 = vsyncadd [#allocation3], %s12
      %s15 = sshll.u32 [#allocation2], 4
      %s16 = int_to_ptr.vmem [resolvable:$true] %s15
      %18 = dma.hbm_to_vmem [thread:$0]  %s0, 256, %s16, [#allocation3]
    $region5: #{tpu_custom_call.1} parent=1 // pred_fallthru
      _
    // Predicated region
    $region6: #{tpu_custom_call.1} parent=1 // pred_check
      _
    $region7: #{tpu_custom_call.1} parent=1 // pred_check_branch
      %20 = sbr.rel (0) target = $region9
    $region8: #{tpu_custom_call.1} parent=1 // pred_region
      _
    $region9: #{tpu_custom_call.1} parent=1 // pred_fallthru
      _
    // Predicated region
    $region10: #{tpu_custom_call.1} parent=1 // pred_check
      _
    $region11: #{tpu_custom_call.1} parent=1 // pred_check_branch
      %22 = sbr.rel (0) target = $region13
    $region12: #{tpu_custom_call.1} parent=1 // pred_region
      %23 = dma.done [#allocation3], 256
    $region13: #{tpu_custom_call.1} parent=1 // pred_fallthru
      _
    %v24 = vld [vmem:[#allocation2] sm:$0xff]
    %v25 = vld [vmem:[#allocation2 + $0x8] sm:$0xff]
    %v26 = vld [vmem:[%s1] sm:$0xff]
    %28 = vset.pattern.permute.xlu0 0
    %29 = vperm.xlu0 %28, %v26
    %v30 = vpop.permute.xlu0 %29
    %v32 = vmul.f32 %v24, %v30
    %v33 = vmul.f32 %v25, %v30
    %34 = vset.pattern.permute.xlu0 2
    %35 = vperm.xlu0 %34, %v26
    %v36 = vpop.permute.xlu0 %35
    %v38 = vadd.f32 %v32, %v36
    %v39 = vadd.f32 %v33, %v36
    %40 = vset.pattern.permute.xlu0 1
    %41 = vperm.xlu0 %40, %v26
    %v42 = vpop.permute.xlu0 %41
    %v44 = vmul.f32 %v24, %v42
    %v45 = vmul.f32 %v25, %v42
    %46 = vset.pattern.permute.xlu0 3
    %47 = vperm.xlu0 %46, %v26
    %v48 = vpop.permute.xlu0 %47
    %v50 = vadd.f32 %v44, %v48
    %v51 = vadd.f32 %v45, %v48
    %v52 = vmax.f32 %v38, %v50
    %v53 = vmax.f32 %v39, %v51
    %54 = vst [vmem:[#allocation5] sm:$0xff] %v52
    %55 = vst [vmem:[#allocation5 + $0x8] sm:$0xff] %v53
    // Predicated region
    $region14: #{tpu_custom_call.1} parent=1 // pred_check
      _
    $region15: #{tpu_custom_call.1} parent=1 // pred_check_branch
      %57 = sbr.rel (0) target = $region17
    $region16: #{tpu_custom_call.1} parent=1 // pred_region
      %s59 = ssub.s32 256, 256
      %60 = vsyncadd [#allocation4], %s59
      %s62 = sshll.u32 [#allocation5], 4
      %s63 = int_to_ptr.vmem [resolvable:$true] %s62
      %65 = dma.vmem_to_hbm [thread:$0]  %s63, 256, %s2, [#allocation4]
    $region17: #{tpu_custom_call.1} parent=1 // pred_fallthru
      _
    // Predicated region
    $region18: #{tpu_custom_call.1} parent=1 // pred_check
      _
    $region19: #{tpu_custom_call.1} parent=1 // pred_check_branch
      %67 = sbr.rel (0) target = $region21
    $region20: #{tpu_custom_call.1} parent=1 // pred_region
      %68 = dma.done [#allocation4], 256
    $region21: #{tpu_custom_call.1} parent=1 // pred_fallthru
      _
    %69 = vsyncpa [#allocation3], 1
    %70 = vsyncpa [#allocation4], 1

</llo_original>
